<compile_context>
chip_gen: v7x
topology: tpu7x:2x2x1
jax: 0.10.0
libtpu: 0.0.40
codegen_flags: <defaults>
</compile_context>

<pallas_src>
import functools

import jax
import jax.numpy as jnp
from jax import lax
from jax.experimental import pallas as pl
from jax.experimental.pallas import tpu as pltpu


_LANES = 128                     # GEMM output-channel padding (lane-dense stores).
# TODO(synk): on v6e/v7x with real ResNet widths (>=256 ch) padding to 256 fills
# the 2x256x256 MXU better; keep 128 on v5e and for narrow layers.
_VMEM_LIMIT = 32 * 1024 * 1024   # safe on v5e / v6e / v7x (v7x physical = 64 MiB)


# ---------------------------------------------------------------------------
# Quantization helpers (shared by kernel parameter prep and the pure-JAX ref).
# TODO(synk): quantize_weight_gemm_S / quantize_bias_gemm /
# quantize_activations_gemm_A / ReLU6S bodies are not in the provided source;
# standard deterministic symmetric 8-bit fake-quant definitions are assumed.
# ---------------------------------------------------------------------------
def quantize_weight_gemm_S(w):
    scale = jnp.maximum(jnp.max(jnp.abs(w)), 1e-8).astype(jnp.float32)
    wq = jnp.round(w / scale * 127.0) / 127.0
    return wq, scale


def quantize_bias_gemm(b):
    return jnp.round(b * 127.0) / 127.0


def quantize_activations_gemm_A(x, a):
    return jnp.round(jnp.clip(x / a, -1.0, 1.0) * 127.0) * (a / 127.0)


def _weight_scale(w):
    # Host scalar so the folded scale constants are compile-time constants.
    return max(float(jnp.max(jnp.abs(w))), 1e-8)


def _round_up(x, m):
    return (x + m - 1) // m * m


def _choose_tm(m, cap=512, min_steps=4):
    """Row tile for the 1x1 GEMMs: multiple of 16 (bf16 sublane packing), large
    (HBM roofline), but with >=min_steps grid steps when m permits (megacore)."""
    tm = min(cap, _round_up(m, 16))
    tm = max(16, tm // 16 * 16)
    while tm > 16 and (m + tm - 1) // tm < min_steps:
        tm = max(16, (tm // 2) // 16 * 16)
    return tm


def _choose_tr(n, ho, wo, c):
    """Output-row tile for the 3x3 kernel: bound the VMEM im2col slab and give
    the grid >=4 steps (v7x has 2 TensorCores)."""
    tr = ho
    while tr > 1 and tr * wo * 9 * c * 2 > (2 << 20):
        tr = (tr + 1) // 2
    while tr > 1 and n * ((ho + tr - 1) // tr) < 4:
        tr = (tr + 1) // 2
    return tr


def _compiler_params():
    return pltpu.CompilerParams(
        dimension_semantics=("parallel",),
        vmem_limit_bytes=_VMEM_LIMIT)


def _pad_rows(x2d, m_pad):
    m = x2d.shape[0]
    return x2d if m_pad == m else jnp.pad(x2d, ((0, m_pad - m), (0, 0)))


# ---------------------------------------------------------------------------
# Pallas kernels
# ---------------------------------------------------------------------------
def _conv1_kernel(x_ref, w_ref, b_ref, o_ref, *, qin, c1, hi1):
    """fake-quant(x)->int levels -> 1x1 GEMM (integer-level weights, exact bf16)
    -> folded ReLU6S + requant epilogue -> integer levels (bf16)."""
    xi = x_ref[...].astype(jnp.float32)
    q = jnp.round(jnp.clip(xi * qin, -127.0, 127.0)).astype(jnp.bfloat16)
    acc = jnp.dot(q, w_ref[...], preferred_element_type=jnp.float32)
    y = (acc + b_ref[...]) * c1
    o_ref[...] = jnp.round(jnp.clip(y, 0.0, hi1)).astype(o_ref.dtype)


def _conv1_kernel_id(x_ref, w_ref, b_ref, o_ref, n_ref, *, qin, c1, hi1):
    """Identity-shortcut variant: also emits the fake-quantized input levels so
    the fused conv3 kernel gets the residual as bf16 without re-quantizing."""
    xi = x_ref[...].astype(jnp.float32)
    q = jnp.round(jnp.clip(xi * qin, -127.0, 127.0)).astype(jnp.bfloat16)
    n_ref[...] = q
    acc = jnp.dot(q, w_ref[...], preferred_element_type=jnp.float32)
    y = (acc + b_ref[...]) * c1
    o_ref[...] = jnp.round(jnp.clip(y, 0.0, hi1)).astype(o_ref.dtype)


def _conv2_kernel(win_ref, w_ref, b_ref, o_ref, *, stride, tr, wo, rows, c2, hi2):
    """3x3 conv (stride, pad=1) on one output-row tile.  The 9 tap views of the
    stride-phase window are concatenated along K in VMEM and fed to ONE MXU dot
    (K = 9*C, f32 internal accumulation), then folded ReLU6S+requant epilogue."""
    cpad = win_ref.shape[3]
    taps = []
    for di in range(3):
        for dj in range(3):
            ri, qi = di % stride, di // stride
            rj, qj = dj % stride, dj // stride
            base = (ri * stride + rj) * rows + qi
            t = win_ref[0, base:base + tr, qj:qj + wo, :]       # (tr, wo, cpad)
            taps.append(t.reshape(tr * wo, cpad))
    lhs = jnp.concatenate(taps, axis=-1)                        # (tr*wo, 9*cpad)
    acc = jnp.dot(lhs, w_ref[...], preferred_element_type=jnp.float32)
    y = (acc + b_ref[...]) * c2
    q = jnp.round(jnp.clip(y, 0.0, hi2))
    o_ref[...] = q.reshape(o_ref.shape).astype(o_ref.dtype)


def _conv3_down_kernel(x_ref, w3_ref, r_ref, ws_ref, b_ref, o_ref, *, c3, cs, qin0):
    """Fused conv3 (1x1) + downsample shortcut 1x1 (residual re-quantized
    in-kernel from the bf16 raw input) + residual add + final ReLU6."""
    d3 = jnp.dot(x_ref[...], w3_ref[...], preferred_element_type=jnp.float32)
    rq = jnp.round(jnp.clip(r_ref[...].astype(jnp.float32) * qin0, -127.0, 127.0))
    ds = jnp.dot(rq.astype(jnp.bfloat16), ws_ref[...],
                 preferred_element_type=jnp.float32)
    o_ref[...] = jnp.clip(d3 * c3 + ds * cs + b_ref[...], 0.0, 6.0).astype(o_ref.dtype)


def _conv3_id_kernel(x_ref, w3_ref, r_ref, b_ref, o_ref, *, c3, rscale):
    """Fused conv3 (1x1) + identity shortcut (bf16 quantized levels emitted by
    conv1) + residual add + final ReLU6."""
    d3 = jnp.dot(x_ref[...], w3_ref[...], preferred_element_type=jnp.float32)
    r = r_ref[...].astype(jnp.float32) * rscale
    co = d3.shape[1]
    if r.shape[1] < co:   # padded output channels (sliced off after the kernel)
        r = jnp.concatenate(
            [r, jnp.zeros((r.shape[0], co - r.shape[1]), jnp.float32)], axis=-1)
    o_ref[...] = jnp.clip(d3 * c3 + b_ref[...] + r, 0.0, 6.0).astype(o_ref.dtype)


# ---------------------------------------------------------------------------
# pallas_call wrappers
# ---------------------------------------------------------------------------
def _run_conv1(x2d, w, bias, qin, c1, hi1, emit_levels):
    m, cin = x2d.shape
    n_out = w.shape[1]
    tm = _choose_tm(m)
    m_pad = _round_up(m, tm)
    xp = _pad_rows(x2d, m_pad)
    grid = (m_pad // tm,)
    in_specs = [
        pl.BlockSpec((tm, cin), lambda i: (i, 0)),
        pl.BlockSpec((cin, n_out), lambda i: (0, 0)),
        pl.BlockSpec((1, n_out), lambda i: (0, 0)),
    ]
    if emit_levels:
        kernel = functools.partial(_conv1_kernel_id, qin=qin, c1=c1, hi1=hi1)
        out, lv = pl.pallas_call(
            kernel,
            out_shape=(jax.ShapeDtypeStruct((m_pad, n_out), jnp.bfloat16),
                       jax.ShapeDtypeStruct((m_pad, cin), jnp.bfloat16)),
            grid=grid,
            in_specs=in_specs,
            out_specs=(pl.BlockSpec((tm, n_out), lambda i: (i, 0)),
                       pl.BlockSpec((tm, cin), lambda i: (i, 0))),
            compiler_params=_compiler_params(),
        )(xp, w, bias)
        return out[:m], lv[:m]
    kernel = functools.partial(_conv1_kernel, qin=qin, c1=c1, hi1=hi1)
    out = pl.pallas_call(
        kernel,
        out_shape=jax.ShapeDtypeStruct((m_pad, n_out), jnp.bfloat16),
        grid=grid,
        in_specs=in_specs,
        out_specs=pl.BlockSpec((tm, n_out), lambda i: (i, 0)),
        compiler_params=_compiler_params(),
    )(xp, w, bias)
    return out[:m], None


def _build_conv2_windows(x_nhwc, stride, tr, qmax, T):
    """Pad + stride-phase decompose + gather per-row-tile windows (one XLA pass).
    TODO(synk): at stride 2 this is still one extra HBM round-trip of the conv1
    activation; writing conv1's output directly into this layout needs
    overlapping (halo) output blocks and is not done here."""
    n, h, w, c = x_nhwc.shape
    hp, wp = h + 2, w + 2
    hq = -(-hp // stride)
    wq = -(-wp // stride)
    xp = jnp.pad(x_nhwc, ((0, 0), (1, 1), (1, 1), (0, 0)))
    if stride == 1:
        phases = xp[:, None]                                 # (n, 1, hp, wp, c)
    else:
        ps = []
        for ri in range(stride):
            for rj in range(stride):
                p = xp[:, ri::stride, rj::stride, :]
                p = jnp.pad(p, ((0, 0), (0, hq - p.shape[1]),
                                (0, wq - p.shape[2]), (0, 0)))
                ps.append(p)
        phases = jnp.stack(ps, axis=1)                       # (n, s*s, hq, wq, c)
    hq_need = T * tr + qmax
    if hq_need > phases.shape[2]:
        phases = jnp.pad(phases, ((0, 0), (0, 0),
                                  (0, hq_need - phases.shape[2]),
                                  (0, 0), (0, 0)))
    rows = tr + qmax
    wins = jnp.stack([phases[:, :, t * tr:t * tr + rows] for t in range(T)],
                     axis=1)                                 # (n, T, S, rows, wq, c)
    return wins.reshape(n * T, stride * stride * rows, wq, c), wq


def _run_conv2(x_nhwc, w9, bias, stride, c2, hi2):
    n, h, w, c = x_nhwc.shape
    cout = w9.shape[1]
    hp, wp = h + 2, w + 2
    ho = (hp - 3) // stride + 1
    wo = (wp - 3) // stride + 1
    qmax = 2 // stride
    tr = _choose_tr(n, ho, wo, c)
    T = (ho + tr - 1) // tr
    rows = tr + qmax
    wins, wq = _build_conv2_windows(x_nhwc, stride, tr, qmax, T)

    kernel = functools.partial(_conv2_kernel, stride=stride, tr=tr, wo=wo,
                               rows=rows, c2=c2, hi2=hi2)
    out = pl.pallas_call(
        kernel,
        out_shape=jax.ShapeDtypeStruct((n * T, tr * wo, cout), jnp.bfloat16),
        grid=(n * T,),
        in_specs=[
            pl.BlockSpec((1, stride * stride * rows, wq, c),
                         lambda g: (g, 0, 0, 0)),
            pl.BlockSpec((w9.shape[0], cout), lambda g: (0, 0)),
            pl.BlockSpec((1, cout), lambda g: (0, 0)),
        ],
        out_specs=pl.BlockSpec((1, tr * wo, cout), lambda g: (g, 0, 0)),
        compiler_params=_compiler_params(),
    )(wins, w9, bias)

    out = out.reshape(n, T * tr, wo, cout)
    if T * tr > ho:
        out = out[:, :ho]
    return out.reshape(n * ho * wo, cout), ho, wo


def _run_conv3(x2d, w3, r2d, ws, bias, c3, cs, qin0, rscale, downsample):
    m, k3 = x2d.shape
    n_out = w3.shape[1]
    kr = r2d.shape[1]
    tm = _choose_tm(m)
    m_pad = _round_up(m, tm)
    xp = _pad_rows(x2d, m_pad)
    rp = _pad_rows(r2d, m_pad)
    grid = (m_pad // tm,)
    # TODO(synk): output stays f32 NCHW to match the PyTorch module; bf16/NHWC
    # output would halve writeback if the caller allowed it.
    if downsample:
        kernel = functools.partial(_conv3_down_kernel, c3=c3, cs=cs, qin0=qin0)
        out = pl.pallas_call(
            kernel,
            out_shape=jax.ShapeDtypeStruct((m_pad, n_out), jnp.float32),
            grid=grid,
            in_specs=[
                pl.BlockSpec((tm, k3), lambda i: (i, 0)),
                pl.BlockSpec((k3, n_out), lambda i: (0, 0)),
                pl.BlockSpec((tm, kr), lambda i: (i, 0)),
                pl.BlockSpec((kr, n_out), lambda i: (0, 0)),
                pl.BlockSpec((1, n_out), lambda i: (0, 0)),
            ],
            out_specs=pl.BlockSpec((tm, n_out), lambda i: (i, 0)),
            compiler_params=_compiler_params(),
        )(xp, w3, rp, ws, bias)
    else:
        kernel = functools.partial(_conv3_id_kernel, c3=c3, rscale=rscale)
        out = pl.pallas_call(
            kernel,
            out_shape=jax.ShapeDtypeStruct((m_pad, n_out), jnp.float32),
            grid=grid,
            in_specs=[
                pl.BlockSpec((tm, k3), lambda i: (i, 0)),
                pl.BlockSpec((k3, n_out), lambda i: (0, 0)),
                pl.BlockSpec((tm, kr), lambda i: (i, 0)),
                pl.BlockSpec((1, n_out), lambda i: (0, 0)),
            ],
            out_specs=pl.BlockSpec((tm, n_out), lambda i: (i, 0)),
            compiler_params=_compiler_params(),
        )(xp, w3, rp, bias)
    return out[:m]


# ---------------------------------------------------------------------------
# Forward pass (glue: layout, channel padding, integer weights, scale folding)
# ---------------------------------------------------------------------------
def bottleneck_forward(x_nchw, params, act_scale, stride):
    n, cin, h, w = x_nchw.shape
    planes = params["conv1_w"].shape[0]
    cout = 4 * planes
    a0, a1, a2 = (float(s) for s in act_scale)
    pl_p = _round_up(planes, _LANES)
    co_p = _round_up(cout, _LANES)
    downsample = (stride != 1) or (cin != cout)

    # NHWC + bf16 activations (halves HBM on the mem-bound 1x1s; values are
    # immediately fake-quantized to 8-bit levels, boundary flips negligible).
    # TODO(synk): the NCHW<->NHWC transposes could be dropped if the caller
    # accepted NHWC directly.
    x = jnp.transpose(x_nchw, (0, 2, 3, 1)).astype(jnp.bfloat16)

    # ----- conv1 (1x1), input fake-quant fused -----
    s1 = _weight_scale(params["conv1_w"])
    w1 = jnp.round(params["conv1_w"] / s1 * 127.0).reshape(planes, cin)
    w1 = jnp.pad(jnp.transpose(w1, (1, 0)), ((0, 0), (0, pl_p - planes)))
    w1 = w1.astype(jnp.bfloat16)                              # exact int levels
    qb1 = quantize_bias_gemm(params["conv1_b"])
    b1 = qb1 * (127.0 ** 2) / (s1 * a0 * a0)
    b1 = jnp.pad(b1, (0, pl_p - planes)).reshape(1, pl_p).astype(jnp.float32)
    c1 = s1 * a0 / (127.0 * a1)
    hi1 = min(6.0 * 127.0 * a0 / a1, 127.0)

    m1 = n * h * w
    out1, levels0 = _run_conv1(x.reshape(m1, cin), w1, b1,
                               qin=127.0 / a0, c1=c1, hi1=hi1,
                               emit_levels=not downsample)
    out1 = out1.reshape(n, h, w, pl_p)

    # ----- conv2 (3x3, stride, pad=1), single big-K dot, row-tiled -----
    s2 = _weight_scale(params["conv2_w"])
    w2 = jnp.round(params["conv2_w"] / s2 * 127.0)            # (planes,planes,3,3)
    w2 = jnp.transpose(w2, (2, 3, 1, 0))                      # (3,3,cin2,cout2)
    w2 = jnp.pad(w2, ((0, 0), (0, 0), (0, pl_p - planes), (0, pl_p - planes)))
    w2 = w2.reshape(9 * pl_p, pl_p).astype(jnp.bfloat16)
    qb2 = quantize_bias_gemm(params["conv2_b"])
    b2 = qb2 * (127.0 ** 2) / (s2 * a1 * a1)
    b2 = jnp.pad(b2, (0, pl_p - planes)).reshape(1, pl_p).astype(jnp.float32)
    c2 = s2 * a1 / (127.0 * a2)
    hi2 = min(6.0 * 127.0 * a1 / a2, 127.0)
    out2, ho, wo = _run_conv2(out1, w2, b2, stride, c2, hi2)

    # ----- conv3 (1x1) + shortcut + residual add + final ReLU6, fused -----
    # TODO(synk): the original forward calls F.conv2d(..., padding=1) on this
    # 1x1 conv, which would enlarge the spatial dims and break `out += residual`;
    # implemented with padding=0 (the only shape-consistent interpretation).
    # The conv2_scale-in-conv3-bias quirk of the original code IS reproduced.
    s3 = _weight_scale(params["conv3_w"])
    w3 = jnp.round(params["conv3_w"] / s3 * 127.0).reshape(cout, planes)
    w3 = jnp.pad(jnp.transpose(w3, (1, 0)),
                 ((0, pl_p - planes), (0, co_p - cout))).astype(jnp.bfloat16)
    qb3 = quantize_bias_gemm(params["conv3_b"])
    b3 = jnp.pad(qb3 * s3 / s2, (0, co_p - cout)).astype(jnp.float32)
    c3 = s3 * a2 * a2 / (127.0 ** 2)

    if downsample:
        ss = _weight_scale(params["short_w"])
        ws = jnp.round(params["short_w"] / ss * 127.0).reshape(cout, cin)
        ws = jnp.pad(jnp.transpose(ws, (1, 0)),
                     ((0, 0), (0, co_p - cout))).astype(jnp.bfloat16)
        qbs = quantize_bias_gemm(params["short_b"])
        bias = (b3 + jnp.pad(qbs, (0, co_p - cout))).reshape(1, co_p)
        bias = bias.astype(jnp.float32)
        cs = ss * a0 * a0 / (127.0 ** 2)
        r2d = x[:, ::stride, ::stride, :].reshape(n * ho * wo, cin)
        out = _run_conv3(out2, w3, r2d, ws, bias, c3, cs, 127.0 / a0, 0.0, True)
    else:
        bias = b3.reshape(1, co_p)
        r2d = levels0                                        # (n*ho*wo, cin) levels
        out = _run_conv3(out2, w3, r2d, None, bias, c3, 0.0, 0.0, a0 / 127.0, False)

    out = out.reshape(n, ho, wo, co_p)[:, :, :, :cout]
    return jnp.transpose(out, (0, 3, 1, 2)).astype(jnp.float32)


# ---------------------------------------------------------------------------
# Pure-JAX (XLA conv) reference of the original forward, for verification.
# ---------------------------------------------------------------------------
def reference_forward(x_nchw, params, act_scale, stride):
    a0, a1, a2 = (float(s) for s in act_scale)
    n, cin, h, w = x_nchw.shape
    planes = params["conv1_w"].shape[0]
    cout = 4 * planes
    downsample = (stride != 1) or (cin != cout)
    # Same bf16-cast input as the Pallas path.
    x = jnp.transpose(x_nchw, (0, 2, 3, 1)).astype(jnp.bfloat16).astype(jnp.float32)

    def conv(v, w_oihw, st, pad):
        w_hwio = jnp.transpose(w_oihw, (2, 3, 1, 0))
        return lax.conv_general_dilated(
            v, w_hwio, window_strides=(st, st),
            padding=((pad, pad), (pad, pad)),
            dimension_numbers=("NHWC", "HWIO", "NHWC"))

    x = quantize_activations_gemm_A(x, a0)
    residual = x
    w1q, s1 = quantize_weight_gemm_S(params["conv1_w"])
    b1 = quantize_bias_gemm(params["conv1_b"]) / (s1 * a0)
    out = (conv(x, w1q, 1, 0) + b1) * s1
    out = jnp.clip(out / a0, 0.0, 6.0) * a0
    out = quantize_activations_gemm_A(out, a1)
    w2q, s2 = quantize_weight_gemm_S(params["conv2_w"])
    b2 = quantize_bias_gemm(params["conv2_b"]) / (s2 * a1)
    out = (conv(out, w2q, stride, 1) + b2) * s2
    out = jnp.clip(out / a1, 0.0, 6.0) * a1
    out = quantize_activations_gemm_A(out, a2)
    w3q, s3 = quantize_weight_gemm_S(params["conv3_w"])
    b3 = quantize_bias_gemm(params["conv3_b"]) / (s2 * a2)      # quirk: s2
    out = (conv(out, w3q, 1, 0) + b3) * s3                      # padding=0 interp.
    out = out * a2
    if downsample:
        wsq, ss = quantize_weight_gemm_S(params["short_w"])
        bs = quantize_bias_gemm(params["short_b"]) / (ss * a0)
        residual = (conv(residual, wsq, stride, 0) + bs) * ss
        residual = residual * a0
    out = jnp.clip(out + residual, 0.0, 6.0)
    return jnp.transpose(out, (0, 3, 1, 2))


# ---------------------------------------------------------------------------
# main
# ---------------------------------------------------------------------------
def _make_params(key, in_planes, planes):
    ks = jax.random.split(key, 8)
    return {
        "conv1_w": 0.1 * jax.random.normal(ks[0], (planes, in_planes, 1, 1), jnp.float32),
        "conv1_b": 0.1 * jax.random.normal(ks[1], (planes,), jnp.float32),
        "conv2_w": 0.1 * jax.random.normal(ks[2], (planes, planes, 3, 3), jnp.float32),
        "conv2_b": 0.1 * jax.random.normal(ks[3], (planes,), jnp.float32),
        "conv3_w": 0.1 * jax.random.normal(ks[4], (4 * planes, planes, 1, 1), jnp.float32),
        "conv3_b": 0.1 * jax.random.normal(ks[5], (4 * planes,), jnp.float32),
        "short_w": 0.1 * jax.random.normal(ks[6], (4 * planes, in_planes, 1, 1), jnp.float32),
        "short_b": 0.1 * jax.random.normal(ks[7], (4 * planes,), jnp.float32),
    }


if __name__ == "__main__":
    key = jax.random.PRNGKey(0)
    act_scale = (0.5, 0.25, 0.125)
    k1, k2, k3, k4 = jax.random.split(key, 4)

    # Downsample path: stride=2, in_planes != 4*planes.
    params_a = _make_params(k1, 16, 8)
    x_a = jax.random.normal(k2, (2, 16, 16, 16), jnp.float32)
    out_a = jax.block_until_ready(bottleneck_forward(x_a, params_a, act_scale, 2))
    assert out_a.shape == (2, 32, 8, 8), out_a.shape
    ref_a = jax.block_until_ready(reference_forward(x_a, params_a, act_scale, 2))
    err_a = float(jnp.max(jnp.abs(out_a - ref_a)))
    assert err_a < 0.1, f"downsample path max|diff|={err_a}"

    # Identity path: stride=1, in_planes == 4*planes.
    params_b = _make_params(k3, 32, 8)
    x_b = jax.random.normal(k4, (2, 32, 8, 8), jnp.float32)
    out_b = jax.block_until_ready(bottleneck_forward(x_b, params_b, act_scale, 1))
    assert out_b.shape == (2, 32, 8, 8), out_b.shape
    ref_b = jax.block_until_ready(reference_forward(x_b, params_b, act_scale, 1))
    err_b = float(jnp.max(jnp.abs(out_b - ref_b)))
    assert err_b < 0.1, f"identity path max|diff|={err_b}"

    assert bool(jnp.all(jnp.isfinite(out_a))) and bool(jnp.all(jnp.isfinite(out_b)))
    print("KERNEL_OK")
</pallas_src>

<mosaic_0001>
module attributes {stable_mosaic.version = 11 : i64} {
  func.func @_conv1_kernel(%arg0: i32, %arg1: memref<128x16xbf16, #tpu.memory_space<vmem>>, %arg2: memref<16x128xbf16, #tpu.memory_space<vmem>>, %arg3: memref<1x128xf32, #tpu.memory_space<vmem>>, %arg4: memref<128x128xbf16, #tpu.memory_space<vmem>>) attributes {dimension_semantics = [#tpu.dimension_semantics<parallel>], iteration_bounds = array<i64: 4>, scalar_prefetch = 0 : i64, scratch_operands = 0 : i64, tpu.core_type = #tpu.core_type<tc>, window_params = [{transform_indices = @transform_0, window_bounds = array<i64: 128, 16>}, {pipeline_mode = #tpu.pipeline_mode<synchronous>, transform_indices = @transform_1, window_bounds = array<i64: 16, 128>}, {pipeline_mode = #tpu.pipeline_mode<synchronous>, transform_indices = @transform_2, window_bounds = array<i64: 1, 128>}, {transform_indices = @transform_3, window_bounds = array<i64: 128, 128>}]} {
    %c0 = arith.constant 0 : index
    %c0_0 = arith.constant 0 : index
    %0 = vector.load %arg1[%c0, %c0_0] : memref<128x16xbf16, #tpu.memory_space<vmem>>, vector<128x16xbf16>
    %1 = arith.extf %0 : vector<128x16xbf16> to vector<128x16xf32>
    %cst = arith.constant 2.540000e+02 : f32
    %2 = vector.broadcast %cst : f32 to vector<128x16xf32>
    %3 = arith.mulf %1, %2 : vector<128x16xf32>
    %cst_1 = arith.constant -1.270000e+02 : f32
    %cst_2 = arith.constant 1.270000e+02 : f32
    %4 = vector.broadcast %cst_1 : f32 to vector<128x16xf32>
    %5 = arith.maximumf %4, %3 : vector<128x16xf32>
    %6 = vector.broadcast %cst_2 : f32 to vector<128x16xf32>
    %7 = arith.minimumf %6, %5 : vector<128x16xf32>
    %8 = math.roundeven %7 : vector<128x16xf32>
    %9 = arith.truncf %8 : vector<128x16xf32> to vector<128x16xbf16>
    %c0_3 = arith.constant 0 : index
    %c0_4 = arith.constant 0 : index
    %10 = vector.load %arg2[%c0_3, %c0_4] : memref<16x128xbf16, #tpu.memory_space<vmem>>, vector<16x128xbf16>
    %cst_5 = arith.constant dense<0.000000e+00> : vector<128x128xf32>
    %11 = tpu.matmul %9, %10, %cst_5 {dimension_numbers = #tpu.dot_dimension_numbers<[1], [0], [0], [1], [0, 0, 1, 1], [], []>} : vector<128x16xbf16>, vector<16x128xbf16>, vector<128x128xf32> -> vector<128x128xf32>
    %c0_6 = arith.constant 0 : index
    %c0_7 = arith.constant 0 : index
    %12 = vector.load %arg3[%c0_6, %c0_7] : memref<1x128xf32, #tpu.memory_space<vmem>>, vector<1x128xf32>
    %13 = vector.broadcast %12 : vector<1x128xf32> to vector<128x128xf32>
    %14 = arith.addf %11, %13 : vector<128x128xf32>
    %cst_8 = arith.constant 0.00328773772 : f32
    %15 = vector.broadcast %cst_8 : f32 to vector<128x128xf32>
    %16 = arith.mulf %14, %15 : vector<128x128xf32>
    %cst_9 = arith.constant 0.000000e+00 : f32
    %cst_10 = arith.constant 1.270000e+02 : f32
    %17 = vector.broadcast %cst_9 : f32 to vector<128x128xf32>
    %18 = arith.maximumf %17, %16 : vector<128x128xf32>
    %19 = vector.broadcast %cst_10 : f32 to vector<128x128xf32>
    %20 = arith.minimumf %19, %18 : vector<128x128xf32>
    %21 = math.roundeven %20 : vector<128x128xf32>
    %22 = arith.truncf %21 : vector<128x128xf32> to vector<128x128xbf16>
    %c0_11 = arith.constant 0 : index
    %c0_12 = arith.constant 0 : index
    %23 = vector.load %arg4[%c0_11, %c0_12] : memref<128x128xbf16, #tpu.memory_space<vmem>>, vector<128x128xbf16>
    tpu.vector_store %arg4[%c0_11, %c0_12], %22 {strides = array<i32>} : memref<128x128xbf16, #tpu.memory_space<vmem>>, vector<128x128xbf16>,
    return
  }
  func.func @transform_0(%arg0: i32) -> (i32, i32) {
    %c0_i32 = arith.constant 0 : i32
    %c0_i32_0 = arith.constant 0 : i32
    return %arg0, %c0_i32 : i32, i32
  }
  func.func @transform_1(%arg0: i32) -> (i32, i32) {
    %c0_i32 = arith.constant 0 : i32
    %c0_i32_0 = arith.constant 0 : i32
    %c0_i32_1 = arith.constant 0 : i32
    return %c0_i32, %c0_i32_0 : i32, i32
  }
  func.func @transform_2(%arg0: i32) -> (i32, i32) {
    %c0_i32 = arith.constant 0 : i32
    %c0_i32_0 = arith.constant 0 : i32
    %c0_i32_1 = arith.constant 0 : i32
    return %c0_i32, %c0_i32_0 : i32, i32
  }
  func.func @transform_3(%arg0: i32) -> (i32, i32) {
    %c0_i32 = arith.constant 0 : i32
    %c0_i32_0 = arith.constant 0 : i32
    return %arg0, %c0_i32 : i32, i32
  }
}

</mosaic_0001>

<llo_original>
// kernel: tpu_custom_call.1
$region0: #{tpu_custom_call.1}
  #allocation0 [shape = 'u32[]', space=smem, size = 0x4, offset = 0x4, fixed_abs, tag = 'smem constant byte address 0x4 - core index']
  #allocation1 [shape = 'u32[144,128]{1,0:T(1,128)}', space=vmem, size = 0x12000, scoped, tag = 'internal scratch']
  %s0 = inlined_call_operand.vmem [shape: bf16[512,16], index: 0, kind: input, shape index: {}]
  %s1 = inlined_call_operand.vmem [shape: bf16[16,128], index: 1, kind: input, shape index: {}]
  %s2 = inlined_call_operand.vmem [shape: f32[1,128], index: 2, kind: input, shape index: {}]
  %s3 = inlined_call_operand.hbm [shape: bf16[512,128], index: 3, kind: output, shape index: {}]
  %s4 = sld [smem:[#allocation0]]
  $region45: #{tpu_custom_call.1} parent=0
    _
  %s6 = ssub.s32 1, %s4
  %s7 = scalar_select 0, %s6, %s4
  $region1: #{tpu_custom_call.1} parent=0
    #allocation2 [shape = 'u8[65536]{0}', space=vmem, size = 0x10000, scoped, tag = 'output window, operand 0']
    #allocation3 [shape = 's32[2]{0}', space=sflag, size = 0x8, scoped, tag = 'scoped memory for tpu_custom_call.1']
    %8 = vsyncpa [#allocation3], 0
    %s9 = scalar_lea.sflag [#allocation3], 1
    %10 = vsyncpa %s9, 0
    loop: start=0, step=1, limit=6
    $region2: #{tpu_custom_call.1} parent=1 // loop_pre_header
      _
    $region3: #{tpu_custom_call.1} parent=1 // loop_header
      %s12 = sphi 0, %s16
      %p13 = scmp.ge.s32.totalorder %s12, 6
      %s22 = sphi 0, %s24
      %s25 = sphi 0, %s22
      %s26 = sphi 0, %s25
      %s42 = sphi 0, %s26
      %s46 = sphi 0, %s46
      %s48 = sphi 0, %s46
      %s49 = sphi 0, %s48
      %s63 = sphi 0, %s49
      %s67 = sphi 0, %s67
      %s69 = sphi 0, %s67
      %s70 = sphi 0, %s69
      %s84 = sphi 0, %s70
      %s90 = sphi 0, %s92
      %s93 = sphi 0, %s90
      %s94 = sphi 0, %s93
      %s110 = sphi 0, %s94
    $region4: #{tpu_custom_call.1} parent=1 // loop_header_branch
      %15 = sbr.rel (%p13) target = $region8
    $region5: #{tpu_custom_call.1} parent=1 // loop_body
      %s17 = ssub.s32 %s12, 1
      %s18 = ssub.s32 %s12, 2
      %s19 = sadd.s32 %s12, 1
      %s20 = ssub.s32 %s12, %s19
      %p21 = scmp.eq.s32.totalorder %s20, 0
      %s23 = sadd.s32 %s22, 1
      %s24 = scalar_select %p21, %s22, %s23
      %p27 = pneg %p21
      %p28 = scmp.eq.s32.totalorder %s12, 3
      %p29 = por %p27, %p28
      %p30 = scmp.ne.s32.totalorder %s22, %s25
      %p31 = scmp.eq.s32.totalorder %s12, 0
      %p32 = por %p30, %p31
      %p33 = scmp.ne.s32.totalorder %s22, %s25
      %p34 = scmp.eq.s32.totalorder %s17, 3
      %p35 = por %p33, %p34
      %p36 = scmp.ne.s32.totalorder %s25, %s26
      %p37 = scmp.eq.s32.totalorder %s17, 0
      %p38 = por %p36, %p37
      %p39 = scmp.ne.s32.totalorder %s25, %s26
      %p40 = scmp.eq.s32.totalorder %s18, 3
      %p41 = por %p39, %p40
      %p43 = scmp.ne.s32.totalorder %s26, %s42
      %p44 = scmp.eq.s32.totalorder %s18, 0
      %p45 = por %p43, %p44
      %s47 = sadd.s32 %s46, 1
      %p50 = scmp.eq.s32.totalorder %s12, 3
      %p51 = scmp.ne.s32.totalorder %s46, %s48
      %p52 = scmp.eq.s32.totalorder %s12, 0
      %p53 = por %p51, %p52
      %p54 = scmp.ne.s32.totalorder %s46, %s48
      %p55 = scmp.eq.s32.totalorder %s17, 3
      %p56 = por %p54, %p55
      %p57 = scmp.ne.s32.totalorder %s48, %s49
      %p58 = scmp.eq.s32.totalorder %s17, 0
      %p59 = por %p57, %p58
      %p60 = scmp.ne.s32.totalorder %s48, %s49
      %p61 = scmp.eq.s32.totalorder %s18, 3
      %p62 = por %p60, %p61
      %p64 = scmp.ne.s32.totalorder %s49, %s63
      %p65 = scmp.eq.s32.totalorder %s18, 0
      %p66 = por %p64, %p65
      %s68 = sadd.s32 %s67, 1
      %p71 = scmp.eq.s32.totalorder %s12, 3
      %p72 = scmp.ne.s32.totalorder %s67, %s69
      %p73 = scmp.eq.s32.totalorder %s12, 0
      %p74 = por %p72, %p73
      %p75 = scmp.ne.s32.totalorder %s67, %s69
      %p76 = scmp.eq.s32.totalorder %s17, 3
      %p77 = por %p75, %p76
      %p78 = scmp.ne.s32.totalorder %s69, %s70
      %p79 = scmp.eq.s32.totalorder %s17, 0
      %p80 = por %p78, %p79
      %p81 = scmp.ne.s32.totalorder %s69, %s70
      %p82 = scmp.eq.s32.totalorder %s18, 3
      %p83 = por %p81, %p82
      %p85 = scmp.ne.s32.totalorder %s70, %s84
      %p86 = scmp.eq.s32.totalorder %s18, 0
      %p87 = por %p85, %p86
      %s88 = ssub.s32 %s12, %s19
      %p89 = scmp.eq.s32.totalorder %s88, 0
      %s91 = sadd.s32 %s90, 1
      %s92 = scalar_select %p89, %s90, %s91
      %p95 = pneg %p89
      %p96 = scmp.eq.s32.totalorder %s12, 3
      %p97 = por %p95, %p96
      %p98 = scmp.ne.s32.totalorder %s90, %s93
      %p99 = scmp.eq.s32.totalorder %s12, 0
      %p100 = por %p98, %p99
      %p101 = scmp.ne.s32.totalorder %s90, %s93
      %p102 = scmp.eq.s32.totalorder %s17, 3
      %p103 = por %p101, %p102
      %p104 = scmp.ne.s32.totalorder %s93, %s94
      %p105 = scmp.eq.s32.totalorder %s17, 0
      %p106 = por %p104, %p105
      %p107 = scmp.ne.s32.totalorder %s93, %s94
      %p108 = scmp.eq.s32.totalorder %s18, 3
      %p109 = por %p107, %p108
      %p111 = scmp.ne.s32.totalorder %s94, %s110
      %p112 = scmp.eq.s32.totalorder %s18, 0
      %p113 = por %p111, %p112
      %p114 = scmp.le.s32.totalorder 1, %s12
      %p115 = scmp.lt.s32.totalorder %s12, 5
      %p116 = pnand %p114, %p115
      %p117 = pneg %p116
      // Predicated region
      $region9: #{tpu_custom_call.1} parent=5 // pred_check
        _
      $region10: #{tpu_custom_call.1} parent=5 // pred_check_branch
        %119 = sbr.rel (%p116) target = $region12
      $region11: #{tpu_custom_call.1} parent=5 // pred_region
        %s120 = ssub.s32 %s12, 1
        // Predicated region
        $region13: #{tpu_custom_call.1} parent=11 // pred_check
          %p121 = pneg %p59
        $region14: #{tpu_custom_call.1} parent=11 // pred_check_branch
          %123 = sbr.rel (%p121) target = $region16
        $region15: #{tpu_custom_call.1} parent=11 // pred_region
          _
        $region16: #{tpu_custom_call.1} parent=11 // pred_fallthru
          _
        // Predicated region
        $region17: #{tpu_custom_call.1} parent=11 // pred_check
          %p124 = pneg %p80
        $region18: #{tpu_custom_call.1} parent=11 // pred_check_branch
          %126 = sbr.rel (%p124) target = $region20
        $region19: #{tpu_custom_call.1} parent=11 // pred_region
          _
        $region20: #{tpu_custom_call.1} parent=11 // pred_fallthru
          _
      $region12: #{tpu_custom_call.1} parent=5 // pred_fallthru
        _
      %p127 = scmp.lt.s32.totalorder %s12, 4
      // Predicated region
      $region21: #{tpu_custom_call.1} parent=5 // pred_check
        %p128 = pneg %p127
      $region22: #{tpu_custom_call.1} parent=5 // pred_check_branch
        %130 = sbr.rel (%p128) target = $region24
      $region23: #{tpu_custom_call.1} parent=5 // pred_region
        // Predicated region
        $region25: #{tpu_custom_call.1} parent=23 // pred_check
          %p131 = pneg %p32
        $region26: #{tpu_custom_call.1} parent=23 // pred_check_branch
          %133 = sbr.rel (%p131) target = $region28
        $region27: #{tpu_custom_call.1} parent=23 // pred_region
          %s134 = smul.u32 16, %s12
          %p135 = scmp.lt.s32.totalorder %s134, 63
          %s136 = scalar_select %p135, %s134, 63
          %s137 = smul.addr %s136, 4
          %s138 = scalar_lea.vmem %s0, %s137
          %s139 = smul.u32 16, %s12
        $region28: #{tpu_custom_call.1} parent=23 // pred_fallthru
          _
      $region24: #{tpu_custom_call.1} parent=5 // pred_fallthru
        _
      %p140 = scmp.le.s32.totalorder 1, %s12
      %p141 = scmp.lt.s32.totalorder %s12, 5
      %p142 = pnand %p140, %p141
      %p143 = pneg %p142
      // Predicated region
      $region29: #{tpu_custom_call.1} parent=5 // pred_check
        _
      $region30: #{tpu_custom_call.1} parent=5 // pred_check_branch
        %145 = sbr.rel (%p142) target = $region32
      $region31: #{tpu_custom_call.1} parent=5 // pred_region
        %s146 = ssub.s32 %s12, 1
        %s147 = smul.u32 16, %s17
        %p148 = scmp.lt.s32.totalorder %s147, 63
        %s149 = scalar_select %p148, %s147, 63
        %s150 = smul.addr %s149, 4
        %s151 = scalar_lea.vmem %s0, %s150
        %p152 = pneg %p38
        %p153 = pneg %p35
        %p154 = pneg %p59
        %p155 = pneg %p56
        %p156 = pneg %p80
        %p157 = pneg %p77
        %p158 = pneg %p106
        %p159 = pneg %p103
        %s160 = sand.u32 %s93, 1
        %s161 = scalar_lea.sflag [#allocation3], %s160
        %s162 = sand.u32 %s93, 1
        %s163 = smul.addr %s162, 64
        %s164 = scalar_lea.vmem [#allocation2], %s163
        %s165 = smul.u32 16, %s17
        %p166 = scmp.lt.s32.totalorder %s165, 63
        %s167 = scalar_select %p166, %s165, 63
        %s168 = smul.addr %s167, 4
        %s169 = scalar_lea.vmem %s0, %s168
        %s170 = smul.u32 16, %s17
        %s171 = smul.u32 16, %s17
        %v173 = vld [vmem:[%s169] sm:$0xf]
        %v174 = vld [vmem:[%s169 + $0x4] sm:$0xf]
        %v175 = vld [vmem:[%s169 + $0x8] sm:$0xf]
        %v176 = vld [vmem:[%s169 + $0xc] sm:$0xf]
        %v177 = vld [vmem:[%s169 + $0x10] sm:$0xf]
        %v178 = vld [vmem:[%s169 + $0x14] sm:$0xf]
        %v179 = vld [vmem:[%s169 + $0x18] sm:$0xf]
        %v180 = vld [vmem:[%s169 + $0x1c] sm:$0xf]
        %v181 = vld [vmem:[%s169 + $0x20] sm:$0xf]
        %v182 = vld [vmem:[%s169 + $0x24] sm:$0xf]
        %v183 = vld [vmem:[%s169 + $0x28] sm:$0xf]
        %v184 = vld [vmem:[%s169 + $0x2c] sm:$0xf]
        %v185 = vld [vmem:[%s169 + $0x30] sm:$0xf]
        %v186 = vld [vmem:[%s169 + $0x34] sm:$0xf]
        %v187 = vld [vmem:[%s169 + $0x38] sm:$0xf]
        %v188 = vld [vmem:[%s169 + $0x3c] sm:$0xf]
        %v189 = vunpack.c.l.bf16 %v173
        %v190 = vunpack.c.l.bf16 %v174
        %v191 = vunpack.c.l.bf16 %v175
        %v192 = vunpack.c.l.bf16 %v176
        %v193 = vunpack.c.l.bf16 %v177
        %v194 = vunpack.c.l.bf16 %v178
        %v195 = vunpack.c.l.bf16 %v179
        %v196 = vunpack.c.l.bf16 %v180
        %v197 = vunpack.c.l.bf16 %v181
        %v198 = vunpack.c.l.bf16 %v182
        %v199 = vunpack.c.l.bf16 %v183
        %v200 = vunpack.c.l.bf16 %v184
        %v201 = vunpack.c.l.bf16 %v185
        %v202 = vunpack.c.l.bf16 %v186
        %v203 = vunpack.c.l.bf16 %v187
        %v204 = vunpack.c.l.bf16 %v188
        %v205 = vmul.f32 %v189, 254.0
        %v206 = vmul.f32 %v190, 254.0
        %v207 = vmul.f32 %v191, 254.0
        %v208 = vmul.f32 %v192, 254.0
        %v209 = vmul.f32 %v193, 254.0
        %v210 = vmul.f32 %v194, 254.0
        %v211 = vmul.f32 %v195, 254.0
        %v212 = vmul.f32 %v196, 254.0
        %v213 = vmul.f32 %v197, 254.0
        %v214 = vmul.f32 %v198, 254.0
        %v215 = vmul.f32 %v199, 254.0
        %v216 = vmul.f32 %v200, 254.0
        %v217 = vmul.f32 %v201, 254.0
        %v218 = vmul.f32 %v202, 254.0
        %v219 = vmul.f32 %v203, 254.0
        %v220 = vmul.f32 %v204, 254.0
        %v221 = vmax.f32 %v205, -127.0
        %v222 = vmax.f32 %v206, -127.0
        %v223 = vmax.f32 %v207, -127.0
        %v224 = vmax.f32 %v208, -127.0
        %v225 = vmax.f32 %v209, -127.0
        %v226 = vmax.f32 %v210, -127.0
        %v227 = vmax.f32 %v211, -127.0
        %v228 = vmax.f32 %v212, -127.0
        %v229 = vmax.f32 %v213, -127.0
        %v230 = vmax.f32 %v214, -127.0
        %v231 = vmax.f32 %v215, -127.0
        %v232 = vmax.f32 %v216, -127.0
        %v233 = vmax.f32 %v217, -127.0
        %v234 = vmax.f32 %v218, -127.0
        %v235 = vmax.f32 %v219, -127.0
        %v236 = vmax.f32 %v220, -127.0
        %v237 = vmin.f32 %v221, 127.0
        %v238 = vmin.f32 %v222, 127.0
        %v239 = vmin.f32 %v223, 127.0
        %v240 = vmin.f32 %v224, 127.0
        %v241 = vmin.f32 %v225, 127.0
        %v242 = vmin.f32 %v226, 127.0
        %v243 = vmin.f32 %v227, 127.0
        %v244 = vmin.f32 %v228, 127.0
        %v245 = vmin.f32 %v229, 127.0
        %v246 = vmin.f32 %v230, 127.0
        %v247 = vmin.f32 %v231, 127.0
        %v248 = vmin.f32 %v232, 127.0
        %v249 = vmin.f32 %v233, 127.0
        %v250 = vmin.f32 %v234, 127.0
        %v251 = vmin.f32 %v235, 127.0
        %v252 = vmin.f32 %v236, 127.0
        %v253 = vround.ne.pseudo %v237
        %v254 = vround.ne.pseudo %v238
        %v255 = vround.ne.pseudo %v239
        %v256 = vround.ne.pseudo %v240
        %v257 = vround.ne.pseudo %v241
        %v258 = vround.ne.pseudo %v242
        %v259 = vround.ne.pseudo %v243
        %v260 = vround.ne.pseudo %v244
        %v261 = vround.ne.pseudo %v245
        %v262 = vround.ne.pseudo %v246
        %v263 = vround.ne.pseudo %v247
        %v264 = vround.ne.pseudo %v248
        %v265 = vround.ne.pseudo %v249
        %v266 = vround.ne.pseudo %v250
        %v267 = vround.ne.pseudo %v251
        %v268 = vround.ne.pseudo %v252
        %v269 = vpack.c.bf16 %v254, %v253
        %v270 = vpack.c.bf16 %v256, %v255
        %v271 = vpack.c.bf16 %v258, %v257
        %v272 = vpack.c.bf16 %v260, %v259
        %v273 = vpack.c.bf16 %v262, %v261
        %v274 = vpack.c.bf16 %v264, %v263
        %v275 = vpack.c.bf16 %v266, %v265
        %v276 = vpack.c.bf16 %v268, %v267
        %v277 = vld [vmem:[%s1] sm:$0xf]
        %v278 = vld [vmem:[%s1 + $0x4] sm:$0xf]
        %v279 = vld [vmem:[%s2] sm:$0x1]
        %v281 = vlaneseq
        %v282 = vshrl.u32 %v281, 7
        %v283 = vsub.s32 0, %v282
        %v284 = vrot.slane %v279, %v283
        %v288 = vunpack.c.l.b16 %v277
        %v289 = vunpack.c.l.b16 %v278
        %v290 = vpack.c.b16 %v289, %v288
        %vm292 = vcmask 130048
        %v294 = vsel %vm292, %v269, 0
        %v297 = vsel %vm292, %v270, 0
        %v300 = vsel %vm292, %v271, 0
        %v303 = vsel %vm292, %v272, 0
        %v306 = vsel %vm292, %v273, 0
        %v309 = vsel %vm292, %v274, 0
        %v312 = vsel %vm292, %v275, 0
        %v315 = vsel %vm292, %v276, 0
        %317 = vmatprep.subr.bf16.mxu0 0
        %318 = vmatpush1.bf16.msra.mxu0 %v290
        %319 = vmatprep.subr.bf16.mxu0 0
        %320 = vmatpush1.bf16.msra.mxu0 0
        %321 = vmatprep.subr.bf16.mxu0 0
        %322 = vmatpush1.bf16.msra.mxu0 0
        %323 = vmatprep.subr.bf16.mxu0 0
        %324 = vmatpush1.bf16.msra.mxu0 0
        %325 = vmatprep.subr.bf16.mxu0 0
        %326 = vmatpush1.bf16.msra.mxu0 0
        %327 = vmatprep.subr.bf16.mxu0 0
        %328 = vmatpush1.bf16.msra.mxu0 0
        %329 = vmatprep.subr.bf16.mxu0 0
        %330 = vmatpush1.bf16.msra.mxu0 0
        %331 = vmatprep.subr.bf16.mxu0 0
        %332 = vmatpush1.bf16.msra.mxu0 0
        %333 = vmatprep.subr.bf16.mxu0 0
        %334 = vmatpush1.bf16.msra.mxu0 0
        %335 = vmatprep.subr.bf16.mxu0 0
        %336 = vmatpush1.bf16.msra.mxu0 0
        %337 = vmatprep.subr.bf16.mxu0 0
        %338 = vmatpush1.bf16.msra.mxu0 0
        %339 = vmatprep.subr.bf16.mxu0 0
        %340 = vmatpush1.bf16.msra.mxu0 0
        %341 = vmatprep.subr.bf16.mxu0 0
        %342 = vmatpush1.bf16.msra.mxu0 0
        %343 = vmatprep.subr.bf16.mxu0 0
        %344 = vmatpush1.bf16.msra.mxu0 0
        %345 = vmatprep.subr.bf16.mxu0 0
        %346 = vmatpush1.bf16.msra.mxu0 0
        %347 = vmatprep.subr.bf16.mxu0 0
        %348 = vmatpush1.bf16.msra.mxu0 0
        %349 = vmatprep.mubr.bf16.mxu0 0
        %350 = vmatmul.mubr.bf16.gmra.mrb[0].mxu0 %v294
        %v351 = vpop.f32.mrb[0].mxu0
        %v352 = vadd.f32 %v284, %v351
        %v353 = vpop.f32.mrb[0].mxu0
        %v354 = vpop.f32.mrb[0].mxu0
        %v355 = vadd.f32 %v284, %v354
        %v356 = vpop.f32.mrb[0].mxu0
        %357 = vmatprep.mubr.bf16.mxu0 0
        %358 = vmatmul.mubr.bf16.gmra.mrb[0].mxu0 %v297
        %v359 = vpop.f32.mrb[0].mxu0
        %v360 = vadd.f32 %v284, %v359
        %v361 = vpop.f32.mrb[0].mxu0
        %v362 = vpop.f32.mrb[0].mxu0
        %v363 = vadd.f32 %v284, %v362
        %v364 = vpop.f32.mrb[0].mxu0
        %365 = vmatprep.mubr.bf16.mxu0 0
        %366 = vmatmul.mubr.bf16.gmra.mrb[0].mxu0 %v300
        %v367 = vpop.f32.mrb[0].mxu0
        %v368 = vadd.f32 %v284, %v367
        %v369 = vpop.f32.mrb[0].mxu0
        %v370 = vpop.f32.mrb[0].mxu0
        %v371 = vadd.f32 %v284, %v370
        %v372 = vpop.f32.mrb[0].mxu0
        %373 = vmatprep.mubr.bf16.mxu0 0
        %374 = vmatmul.mubr.bf16.gmra.mrb[0].mxu0 %v303
        %v375 = vpop.f32.mrb[0].mxu0
        %v376 = vadd.f32 %v284, %v375
        %v377 = vpop.f32.mrb[0].mxu0
        %v378 = vpop.f32.mrb[0].mxu0
        %v379 = vadd.f32 %v284, %v378
        %v380 = vpop.f32.mrb[0].mxu0
        %381 = vmatprep.mubr.bf16.mxu0 0
        %382 = vmatmul.mubr.bf16.gmra.mrb[0].mxu0 %v306
        %v383 = vpop.f32.mrb[0].mxu0
        %v384 = vadd.f32 %v284, %v383
        %v385 = vpop.f32.mrb[0].mxu0
        %v386 = vpop.f32.mrb[0].mxu0
        %v387 = vadd.f32 %v284, %v386
        %v388 = vpop.f32.mrb[0].mxu0
        %389 = vmatprep.mubr.bf16.mxu0 0
        %390 = vmatmul.mubr.bf16.gmra.mrb[0].mxu0 %v309
        %v391 = vpop.f32.mrb[0].mxu0
        %v392 = vadd.f32 %v284, %v391
        %v393 = vpop.f32.mrb[0].mxu0
        %v394 = vpop.f32.mrb[0].mxu0
        %v395 = vadd.f32 %v284, %v394
        %v396 = vpop.f32.mrb[0].mxu0
        %397 = vmatprep.mubr.bf16.mxu0 0
        %398 = vmatmul.mubr.bf16.gmra.mrb[0].mxu0 %v312
        %v399 = vpop.f32.mrb[0].mxu0
        %v400 = vadd.f32 %v284, %v399
        %v401 = vpop.f32.mrb[0].mxu0
        %v402 = vpop.f32.mrb[0].mxu0
        %v403 = vadd.f32 %v284, %v402
        %v404 = vpop.f32.mrb[0].mxu0
        %405 = vmatprep.mubr.bf16.mxu0 0
        %406 = vmatmul.mubr.bf16.gmra.mrb[0].mxu0 %v315
        %v407 = vpop.f32.mrb[0].mxu0
        %v408 = vadd.f32 %v284, %v407
        %v409 = vpop.f32.mrb[0].mxu0
        %v410 = vpop.f32.mrb[0].mxu0
        %v411 = vadd.f32 %v284, %v410
        %v412 = vpop.f32.mrb[0].mxu0
        %413 = vdwg.mxu0
        %v414 = vmul.f32 %v352, 0.0032877377
        %v415 = vmul.f32 %v355, 0.0032877377
        %v416 = vmul.f32 %v360, 0.0032877377
        %v417 = vmul.f32 %v363, 0.0032877377
        %v418 = vmul.f32 %v368, 0.0032877377
        %v419 = vmul.f32 %v371, 0.0032877377
        %v420 = vmul.f32 %v376, 0.0032877377
        %v421 = vmul.f32 %v379, 0.0032877377
        %v422 = vmul.f32 %v384, 0.0032877377
        %v423 = vmul.f32 %v387, 0.0032877377
        %v424 = vmul.f32 %v392, 0.0032877377
        %v425 = vmul.f32 %v395, 0.0032877377
        %v426 = vmul.f32 %v400, 0.0032877377
        %v427 = vmul.f32 %v403, 0.0032877377
        %v428 = vmul.f32 %v408, 0.0032877377
        %v429 = vmul.f32 %v411, 0.0032877377
        %v430 = vmax.f32 %v414, 0.0
        %v431 = vmax.f32 %v415, 0.0
        %v432 = vmax.f32 %v416, 0.0
        %v433 = vmax.f32 %v417, 0.0
        %v434 = vmax.f32 %v418, 0.0
        %v435 = vmax.f32 %v419, 0.0
        %v436 = vmax.f32 %v420, 0.0
        %v437 = vmax.f32 %v421, 0.0
        %v438 = vmax.f32 %v422, 0.0
        %v439 = vmax.f32 %v423, 0.0
        %v440 = vmax.f32 %v424, 0.0
        %v441 = vmax.f32 %v425, 0.0
        %v442 = vmax.f32 %v426, 0.0
        %v443 = vmax.f32 %v427, 0.0
        %v444 = vmax.f32 %v428, 0.0
        %v445 = vmax.f32 %v429, 0.0
        %v446 = vmin.f32 %v430, 127.0
        %v447 = vmin.f32 %v431, 127.0
        %v448 = vmin.f32 %v432, 127.0
        %v449 = vmin.f32 %v433, 127.0
        %v450 = vmin.f32 %v434, 127.0
        %v451 = vmin.f32 %v435, 127.0
        %v452 = vmin.f32 %v436, 127.0
        %v453 = vmin.f32 %v437, 127.0
        %v454 = vmin.f32 %v438, 127.0
        %v455 = vmin.f32 %v439, 127.0
        %v456 = vmin.f32 %v440, 127.0
        %v457 = vmin.f32 %v441, 127.0
        %v458 = vmin.f32 %v442, 127.0
        %v459 = vmin.f32 %v443, 127.0
        %v460 = vmin.f32 %v444, 127.0
        %v461 = vmin.f32 %v445, 127.0
        %v462 = vround.ne.pseudo %v446
        %v463 = vround.ne.pseudo %v447
        %v464 = vround.ne.pseudo %v448
        %v465 = vround.ne.pseudo %v449
        %v466 = vround.ne.pseudo %v450
        %v467 = vround.ne.pseudo %v451
        %v468 = vround.ne.pseudo %v452
        %v469 = vround.ne.pseudo %v453
        %v470 = vround.ne.pseudo %v454
        %v471 = vround.ne.pseudo %v455
        %v472 = vround.ne.pseudo %v456
        %v473 = vround.ne.pseudo %v457
        %v474 = vround.ne.pseudo %v458
        %v475 = vround.ne.pseudo %v459
        %v476 = vround.ne.pseudo %v460
        %v477 = vround.ne.pseudo %v461
        %v478 = vpack.c.bf16 %v463, %v462
        %v479 = vpack.c.bf16 %v465, %v464
        %v480 = vpack.c.bf16 %v467, %v466
        %v481 = vpack.c.bf16 %v469, %v468
        %v482 = vpack.c.bf16 %v471, %v470
        %v483 = vpack.c.bf16 %v473, %v472
        %v484 = vpack.c.bf16 %v475, %v474
        %v485 = vpack.c.bf16 %v477, %v476
        %v494 = vunpack.c.l.b16 %v478
        %v495 = vunpack.c.h.b16 %v478
        %v496 = vunpack.c.l.b16 %v479
        %v497 = vunpack.c.h.b16 %v479
        %v498 = vunpack.c.l.b16 %v480
        %v499 = vunpack.c.h.b16 %v480
        %v500 = vunpack.c.l.b16 %v481
        %v501 = vunpack.c.h.b16 %v481
        %v502 = vunpack.c.l.b16 %v482
        %v503 = vunpack.c.h.b16 %v482
        %v504 = vunpack.c.l.b16 %v483
        %v505 = vunpack.c.h.b16 %v483
        %v506 = vunpack.c.l.b16 %v484
        %v507 = vunpack.c.h.b16 %v484
        %v508 = vunpack.c.l.b16 %v485
        %v509 = vunpack.c.h.b16 %v485
        %v510 = vpack.c.b16 %v494, %v494
        %v511 = vpack.c.b16 %v495, %v495
        %v512 = vpack.c.b16 %v496, %v496
        %v513 = vpack.c.b16 %v497, %v497
        %v514 = vpack.c.b16 %v498, %v498
        %v515 = vpack.c.b16 %v499, %v499
        %v516 = vpack.c.b16 %v500, %v500
        %v517 = vpack.c.b16 %v501, %v501
        %v518 = vpack.c.b16 %v502, %v502
        %v519 = vpack.c.b16 %v503, %v503
        %v520 = vpack.c.b16 %v504, %v504
        %v521 = vpack.c.b16 %v505, %v505
        %v522 = vpack.c.b16 %v506, %v506
        %v523 = vpack.c.b16 %v507, %v507
        %v524 = vpack.c.b16 %v508, %v508
        %v525 = vpack.c.b16 %v509, %v509
        %542 = vst [vmem:[%s164] sm:$0xf] %v510
        %543 = vst [vmem:[%s164 + $0x4] sm:$0xf] %v511
        %544 = vst [vmem:[%s164 + $0x8] sm:$0xf] %v512
        %545 = vst [vmem:[%s164 + $0xc] sm:$0xf] %v513
        %546 = vst [vmem:[%s164 + $0x10] sm:$0xf] %v514
        %547 = vst [vmem:[%s164 + $0x14] sm:$0xf] %v515
        %548 = vst [vmem:[%s164 + $0x18] sm:$0xf] %v516
        %549 = vst [vmem:[%s164 + $0x1c] sm:$0xf] %v517
        %550 = vst [vmem:[%s164 + $0x20] sm:$0xf] %v518
        %551 = vst [vmem:[%s164 + $0x24] sm:$0xf] %v519
        %552 = vst [vmem:[%s164 + $0x28] sm:$0xf] %v520
        %553 = vst [vmem:[%s164 + $0x2c] sm:$0xf] %v521
        %554 = vst [vmem:[%s164 + $0x30] sm:$0xf] %v522
        %555 = vst [vmem:[%s164 + $0x34] sm:$0xf] %v523
        %556 = vst [vmem:[%s164 + $0x38] sm:$0xf] %v524
        %557 = vst [vmem:[%s164 + $0x3c] sm:$0xf] %v525
        %s558 = sand.u32 %s93, 1
        %s559 = scalar_lea.sflag [#allocation3], %s558
        %s560 = sand.u32 %s93, 1
        %s561 = smul.addr %s560, 64
        %s562 = scalar_lea.vmem [#allocation2], %s561
        // Predicated region
        $region33: #{tpu_custom_call.1} parent=31 // pred_check
          %p563 = pneg %p103
        $region34: #{tpu_custom_call.1} parent=31 // pred_check_branch
          %565 = sbr.rel (%p563) target = $region36
        $region35: #{tpu_custom_call.1} parent=31 // pred_region
          %s566 = smul.u32 16, %s17
          %s568 = ssub.s32 1024, 1024
          %569 = vsyncadd %s559, %s568
          %s570 = smul.addr %s566, 64
          %s571 = scalar_lea.hbm %s3, %s570
          %s572 = sshll.u32 %s562, 4
          %s573 = int_to_ptr.vmem [resolvable:$true] %s572
          %578 = dma.vmem_to_hbm [thread:$0]  %s573, 1024, %s571, %s559, 64, 64, 4
        $region36: #{tpu_custom_call.1} parent=31 // pred_fallthru
          _
      $region32: #{tpu_custom_call.1} parent=5 // pred_fallthru
        _
      %p579 = scmp.le.s32.totalorder 2, %s12
      // Predicated region
      $region37: #{tpu_custom_call.1} parent=5 // pred_check
        %p580 = pneg %p579
      $region38: #{tpu_custom_call.1} parent=5 // pred_check_branch
        %582 = sbr.rel (%p580) target = $region40
      $region39: #{tpu_custom_call.1} parent=5 // pred_region
        %s583 = ssub.s32 %s12, 2
        // Predicated region
        $region41: #{tpu_custom_call.1} parent=39 // pred_check
          %p584 = pneg %p109
        $region42: #{tpu_custom_call.1} parent=39 // pred_check_branch
          %586 = sbr.rel (%p584) target = $region44
        $region43: #{tpu_custom_call.1} parent=39 // pred_region
          %s587 = sand.u32 %s94, 1
          %s588 = scalar_lea.sflag [#allocation3], %s587
          %s589 = sand.u32 %s94, 1
          %s590 = smul.addr %s589, 64
          %s591 = scalar_lea.vmem [#allocation2], %s590
          %592 = dma.done %s588, 1024
        $region44: #{tpu_custom_call.1} parent=39 // pred_fallthru
          _
      $region40: #{tpu_custom_call.1} parent=5 // pred_fallthru
        _
    $region6: #{tpu_custom_call.1} parent=1 // loop_footer
      %s16 = sadd.s32 1, %s12
    $region7: #{tpu_custom_call.1} parent=1 // loop_footer_branch
      %11 = sbr.rel target = $region3
    $region8: #{tpu_custom_call.1} parent=1 // loop_exit
      _
    %593 = vsyncpa [#allocation3], 1
    %s594 = scalar_lea.sflag [#allocation3], 1
    %595 = vsyncpa %s594, 1

</llo_original>
